<compile_context>
chip_gen: v7x
topology: tpu7x:2x2x1
jax: 0.10.0
libtpu: 0.0.40
codegen_flags: <defaults>
</compile_context>

<pallas_src>
import functools
import math

import jax
import jax.numpy as jnp
from jax.experimental import pallas as pl
from jax.experimental.pallas import tpu as pltpu

LANE = 128
SUBLANE = 8
DEFAULT_BLOCK_ROWS = 2048  # (2048,128) f32 = 1 MiB/input/buffer; 2 in x 2 buf = 4 MiB VMEM


def _static_pow(v, gamma):
    """v**gamma with small integer gamma lowered to VPU multiplies (no EUP pow)."""
    g = float(gamma)
    if g == 0.0:
        return jnp.ones_like(v)
    if g == int(g) and 1.0 <= g <= 4.0:
        out = v
        for _ in range(int(g) - 1):
            out = out * v
        return out
    return jnp.power(v, g)


def _focal_kernel(x_ref, t_ref, loss_ref, *,
                  gamma, alpha, log_lo, log_hi,
                  n_elems, block_rows, blocks_per_core, needs_mask):
    c = pl.program_id(0)   # core / parallel axis
    i = pl.program_id(1)   # reduction axis over row-blocks

    # Output block (c, 0) is VMEM-resident across the i loop -> use it as accumulator.
    @pl.when(i == 0)
    def _():
        loss_ref[...] = jnp.zeros_like(loss_ref)

    def tile_terms(x_f32, t):
        # Un-negated, un-scaled focal terms for one tile (negation & 1/N folded into
        # the wrapper epilogue).
        ls = jax.nn.log_sigmoid(x_f32)                 # EUP (exp + log1p)
        log_p = jnp.clip(ls, log_lo, log_hi)           # == log(clamp(sigmoid(x)))
        prob = jnp.exp(log_p)                          # == clamp(sigmoid(x), smooth, 1-smooth)
        log_sig_neg = ls - x_f32                       # == log_sigmoid(-x), pure VPU
        pos_term = _static_pow(1.0 - prob, gamma) * log_p
        neg_term = _static_pow(prob, gamma) * log_sig_neg
        if alpha != 1.0:
            neg_term = neg_term * jnp.float32(alpha)
        if t.dtype == jnp.bool_:
            is_pos, is_neg = t, jnp.logical_not(t)
        else:
            is_pos, is_neg = (t == 1), (t == 0)
        return jnp.where(is_pos, pos_term, jnp.where(is_neg, neg_term, 0.0))

    def fold(sel):
        # Pure-VPU fold of the big tile down to the (8,128) accumulator layout.
        return sel.reshape(block_rows // SUBLANE, SUBLANE, LANE).sum(axis=0)

    def fast_path():
        loss_ref[...] += fold(tile_terms(x_ref[...].astype(jnp.float32), t_ref[...]))

    def masked_path():
        # Covers the ragged last block and any clamp-duplicated block: element-level
        # validity mask; masked logits are zeroed BEFORE the transcendentals so padded
        # VMEM garbage (possibly NaN/Inf) can never contaminate the sum.
        row0 = (c * blocks_per_core + i) * block_rows
        rid = jax.lax.broadcasted_iota(jnp.int32, (block_rows, LANE), 0)
        lid = jax.lax.broadcasted_iota(jnp.int32, (block_rows, LANE), 1)
        valid = (row0 + rid) * LANE + lid < n_elems
        x = jnp.where(valid, x_ref[...].astype(jnp.float32), 0.0)
        sel = jnp.where(valid, tile_terms(x, t_ref[...]), 0.0)
        loss_ref[...] += fold(sel)

    if needs_mask:
        block_elems = block_rows * LANE
        is_full = (c * blocks_per_core + i) * block_elems + block_elems <= n_elems
        pl.when(is_full)(fast_path)
        pl.when(jnp.logical_not(is_full))(masked_path)
    else:
        # Statically known: every block is fully in-bounds -> no masking anywhere.
        fast_path()


def _core_axis_semantics(num_cores):
    """CORE_PARALLEL only where it is real (TPU7x: 2 TensorCores/chip); plain
    PARALLEL elsewhere (harmless on 1-TC v5e/v6e)."""
    if num_cores == 2 and hasattr(pltpu, "CORE_PARALLEL"):
        try:
            kind = jax.devices()[0].device_kind.lower()
        except Exception:
            kind = ""
        if ("v7" in kind) or ("tpu7" in kind) or ("7x" in kind):
            return pltpu.CORE_PARALLEL
    return pltpu.PARALLEL


def binary_focal_loss(output, target, *, gamma=2.0, alpha=1.0, smooth=1e-6,
                      block_rows=DEFAULT_BLOCK_ROWS):
    """output: (N, C, H, W) logits (any float dtype); target: (N, H, W) hard binary
    labels (bool / int / float). Returns the scalar mean focal loss (f32)."""
    # torch: target.unsqueeze(dim=1), broadcast against the (N, C, H, W) logits.
    if output.ndim == target.ndim + 1:
        if output.shape[1] == 1:
            # Same element count and ordering as the logits: no broadcast copy,
            # target streams at its native dtype.
            t_full = target
        else:
            # TODO(synk): for C > 1 reuse the target block across the channel axis via
            # the index_map instead of materializing C copies (saves (C-1)/C of t traffic).
            t_full = jnp.broadcast_to(target[:, None, ...], output.shape)
    else:
        t_full = jnp.broadcast_to(target, output.shape)

    x = output.reshape(-1)          # native dtype (bf16/f32/...)
    t = t_full.reshape(-1)          # native dtype (bool/int8/bf16/f32/...)
    n_elems = int(x.size)
    assert int(t.size) == n_elems

    # Pad only the (<128-elem) ragged tail to a lane multiple; zero padding is safe
    # for every dtype because the in-kernel element mask drops its contribution.
    pad = (-n_elems) % LANE
    if pad:
        x = jnp.pad(x, (0, pad))
        t = jnp.pad(t, (0, pad))
    rows = (n_elems + pad) // LANE
    x2 = x.reshape(rows, LANE)
    t2 = t.reshape(rows, LANE)

    # block_rows must be a multiple of the sublane-packing factor of the narrowest
    # streamed dtype (f32 -> 8, bf16 -> 16, int8/bool -> 32); round & clamp.
    def sub_mult(dt):
        return SUBLANE * max(1, 4 // max(1, dt.itemsize))
    mult = max(sub_mult(x2.dtype), sub_mult(t2.dtype))
    rows_up = -(-rows // mult) * mult
    block_rows = max(mult, min((int(block_rows) // mult) * mult, rows_up))

    num_blocks = -(-rows // block_rows)
    num_cores = 2 if num_blocks >= 2 else 1
    blocks_per_core = -(-num_blocks // num_cores)
    max_block = num_blocks - 1
    needs_mask = (n_elems % (block_rows * LANE) != 0) or (num_cores * blocks_per_core != num_blocks)

    def data_map(c, i):
        # Clamp so a duplicated trailing block never indexes outside the array; its
        # (double-counted) contribution is zeroed by the in-kernel element mask.
        return (jnp.minimum(c * blocks_per_core + i, max_block), 0)

    kernel = functools.partial(
        _focal_kernel,
        gamma=float(gamma), alpha=float(alpha),
        log_lo=math.log(float(smooth)), log_hi=math.log1p(-float(smooth)),
        n_elems=n_elems, block_rows=block_rows,
        blocks_per_core=blocks_per_core, needs_mask=needs_mask)

    cost = pl.CostEstimate(
        flops=int(20 * n_elems),
        transcendentals=int(3 * n_elems),
        bytes_accessed=int(x2.size) * x2.dtype.itemsize
        + int(t2.size) * t2.dtype.itemsize
        + num_cores * SUBLANE * LANE * 4)

    partials = pl.pallas_call(
        kernel,
        out_shape=jax.ShapeDtypeStruct((num_cores * SUBLANE, LANE), jnp.float32),
        grid_spec=pltpu.PrefetchScalarGridSpec(
            num_scalar_prefetch=0,
            grid=(num_cores, blocks_per_core),
            in_specs=[pl.BlockSpec((block_rows, LANE), data_map),
                      pl.BlockSpec((block_rows, LANE), data_map)],
            out_specs=pl.BlockSpec((SUBLANE, LANE), lambda c, i: (c, 0)),
        ),
        compiler_params=pltpu.CompilerParams(
            dimension_semantics=(_core_axis_semantics(num_cores), pltpu.ARBITRARY),
        ),
        cost_estimate=cost,
    )(x2, t2)

    # Final cross-lane reduce + global negation + 1/N scale (mean), done once here.
    return jnp.sum(partials) * (-1.0 / float(n_elems))


def _reference_loss(output, target, *, gamma=2.0, alpha=1.0, smooth=1e-6):
    """Pure-JAX mirror of the PyTorch forward (clip(sigmoid)+log, jnp.power)."""
    output = output.astype(jnp.float32)
    target = jnp.broadcast_to(target[:, None, ...].astype(jnp.float32), output.shape)
    prob = jnp.clip(jax.nn.sigmoid(output), smooth, 1.0 - smooth)
    pos_mask = (target == 1.0).astype(jnp.float32)
    neg_mask = (target == 0.0).astype(jnp.float32)
    pos_loss = -pos_mask * jnp.power(1.0 - prob, gamma) * jnp.log(prob)
    neg_loss = -alpha * neg_mask * jnp.power(prob, gamma) * jax.nn.log_sigmoid(-output)
    return jnp.mean(pos_loss + neg_loss)


if __name__ == "__main__":
    # gamma / alpha would come from train_config in the original module;
    # set them deterministically here.
    GAMMA = 2.0
    ALPHA = 1.0

    key = jax.random.PRNGKey(0)
    k1, k2 = jax.random.split(key)
    N, C, H, W = 2, 1, 16, 16  # binary segmentation logits: one channel
    # bf16 logits exercise the native-dtype streaming path; targets are hard 0/1 floats.
    logits = (jax.random.normal(k1, (N, C, H, W), dtype=jnp.float32) * 2.0).astype(jnp.bfloat16)
    target = jax.random.bernoulli(k2, 0.4, (N, H, W)).astype(jnp.float32)

    loss = binary_focal_loss(logits, target, gamma=GAMMA, alpha=ALPHA)
    loss = jax.block_until_ready(loss)

    ref = _reference_loss(logits, target, gamma=GAMMA, alpha=ALPHA)
    # ULP-level differences only: exp/log identities vs clamp(sigmoid)+log, and
    # gamma==2 via multiply instead of pow.
    assert jnp.allclose(loss, ref, rtol=2e-4, atol=1e-6), (loss, ref)
    print("KERNEL_OK")
</pallas_src>

<mosaic_0001>
module attributes {stable_mosaic.version = 11 : i64} {
  func.func @_focal_kernel(%arg0: i32, %arg1: i32, %arg2: memref<16x128xbf16, #tpu.memory_space<vmem>>, %arg3: memref<16x128xf32, #tpu.memory_space<vmem>>, %arg4: memref<8x128xf32, #tpu.memory_space<vmem>>) attributes {dimension_semantics = [#tpu.dimension_semantics<parallel>, #tpu.dimension_semantics<arbitrary>], iteration_bounds = array<i64: 1, 1>, scalar_prefetch = 0 : i64, scratch_operands = 0 : i64, tpu.core_type = #tpu.core_type<tc>, window_params = [{transform_indices = @transform_0, window_bounds = array<i64: 16, 128>}, {transform_indices = @transform_1, window_bounds = array<i64: 16, 128>}, {transform_indices = @transform_2, window_bounds = array<i64: 8, 128>}]} {
    %c0_i32 = arith.constant 0 : i32
    %0 = arith.cmpi eq, %arg1, %c0_i32 : i32
    %1 = arith.extui %0 : i1 to i32
    %c0_i32_0 = arith.constant 0 : i32
    %2 = arith.cmpi ne, %1, %c0_i32_0 : i32
    scf.if %2 {
      %cst = arith.constant 0.000000e+00 : f32
      %13 = vector.broadcast %cst : f32 to vector<8x128xf32>
      %c0 = arith.constant 0 : index
      %c0_4 = arith.constant 0 : index
      %14 = vector.load %arg4[%c0, %c0_4] : memref<8x128xf32, #tpu.memory_space<vmem>>, vector<8x128xf32>
      tpu.vector_store %arg4[%c0, %c0_4], %13 {strides = array<i32>} : memref<8x128xf32, #tpu.memory_space<vmem>>, vector<8x128xf32>,
    } else {
    }
    %c1_i32 = arith.constant 1 : i32
    %3 = arith.muli %arg0, %c1_i32 : i32
    %4 = arith.addi %3, %arg1 : i32
    %c2048_i32 = arith.constant 2048 : i32
    %5 = arith.muli %4, %c2048_i32 : i32
    %c2048_i32_1 = arith.constant 2048 : i32
    %6 = arith.addi %5, %c2048_i32_1 : i32
    %c512_i32 = arith.constant 512 : i32
    %7 = arith.cmpi sle, %6, %c512_i32 : i32
    %8 = arith.extui %7 : i1 to i32
    %c0_i32_2 = arith.constant 0 : i32
    %9 = arith.cmpi ne, %8, %c0_i32_2 : i32
    scf.if %9 {
      %c0 = arith.constant 0 : index
      %c0_4 = arith.constant 0 : index
      %13 = vector.load %arg4[%c0, %c0_4] : memref<8x128xf32, #tpu.memory_space<vmem>>, vector<8x128xf32>
      %c0_5 = arith.constant 0 : index
      %c0_6 = arith.constant 0 : index
      %14 = vector.load %arg2[%c0_5, %c0_6] : memref<16x128xbf16, #tpu.memory_space<vmem>>, vector<16x128xbf16>
      %15 = arith.extf %14 : vector<16x128xbf16> to vector<16x128xf32>
      %c0_7 = arith.constant 0 : index
      %c0_8 = arith.constant 0 : index
      %16 = vector.load %arg3[%c0_7, %c0_8] : memref<16x128xf32, #tpu.memory_space<vmem>>, vector<16x128xf32>
      %cst = arith.constant 0.000000e+00 : f32
      %17 = vector.broadcast %cst : f32 to vector<16x128xf32>
      %18 = arith.subf %17, %15 : vector<16x128xf32>
      %cst_9 = arith.constant 0.000000e+00 : f32
      %19 = vector.broadcast %cst_9 : f32 to vector<16x128xf32>
      %20 = arith.maximumf %18, %19 : vector<16x128xf32>
      %21 = vector.broadcast %cst_9 : f32 to vector<16x128xf32>
      %22 = arith.subf %18, %21 : vector<16x128xf32>
      %23 = arith.cmpf one, %22, %22 : vector<16x128xf32>
      %24 = vector.broadcast %cst_9 : f32 to vector<16x128xf32>
      %25 = arith.addf %18, %24 : vector<16x128xf32>
      %26 = math.absf %22 : vector<16x128xf32>
      %cst_10 = arith.constant 0.000000e+00 : f32
      %27 = vector.broadcast %cst_10 : f32 to vector<16x128xf32>
      %28 = arith.subf %27, %26 : vector<16x128xf32>
      %29 = math.exp %28 : vector<16x128xf32>
      %30 = math.log1p %29 : vector<16x128xf32>
      %31 = arith.addf %20, %30 : vector<16x128xf32>
      %32 = arith.select %23, %25, %31 : vector<16x128xi1>, vector<16x128xf32>
      %cst_11 = arith.constant 0.000000e+00 : f32
      %33 = vector.broadcast %cst_11 : f32 to vector<16x128xf32>
      %34 = arith.subf %33, %32 : vector<16x128xf32>
      %cst_12 = arith.constant -13.8155107 : f32
      %cst_13 = arith.constant -1.00000045E-6 : f32
      %35 = vector.broadcast %cst_12 : f32 to vector<16x128xf32>
      %36 = arith.maximumf %35, %34 : vector<16x128xf32>
      %37 = vector.broadcast %cst_13 : f32 to vector<16x128xf32>
      %38 = arith.minimumf %37, %36 : vector<16x128xf32>
      %39 = math.exp %38 : vector<16x128xf32>
      %40 = arith.subf %34, %15 : vector<16x128xf32>
      %cst_14 = arith.constant 1.000000e+00 : f32
      %41 = vector.broadcast %cst_14 : f32 to vector<16x128xf32>
      %42 = arith.subf %41, %39 : vector<16x128xf32>
      %43 = arith.mulf %42, %42 : vector<16x128xf32>
      %44 = arith.mulf %43, %38 : vector<16x128xf32>
      %45 = arith.mulf %39, %39 : vector<16x128xf32>
      %46 = arith.mulf %45, %40 : vector<16x128xf32>
      %cst_15 = arith.constant 1.000000e+00 : f32
      %47 = vector.broadcast %cst_15 : f32 to vector<16x128xf32>
      %48 = arith.cmpf oeq, %16, %47 : vector<16x128xf32>
      %cst_16 = arith.constant 0.000000e+00 : f32
      %49 = vector.broadcast %cst_16 : f32 to vector<16x128xf32>
      %50 = arith.cmpf oeq, %16, %49 : vector<16x128xf32>
      %cst_17 = arith.constant 0.000000e+00 : f32
      %51 = vector.broadcast %cst_17 : f32 to vector<16x128xf32>
      %52 = arith.select %50, %46, %51 : vector<16x128xi1>, vector<16x128xf32>
      %53 = arith.select %48, %44, %52 : vector<16x128xi1>, vector<16x128xf32>
      %54 = vector.shape_cast %53 : vector<16x128xf32> to vector<2x8x128xf32>
      %cst_18 = arith.constant dense<0.000000e+00> : vector<8x128xf32>
      %55 = vector.multi_reduction <add>, %54, %cst_18 [0] : vector<2x8x128xf32> to vector<8x128xf32>
      %56 = arith.addf %13, %55 : vector<8x128xf32>
      %c0_19 = arith.constant 0 : index
      %c0_20 = arith.constant 0 : index
      %57 = vector.load %arg4[%c0_19, %c0_20] : memref<8x128xf32, #tpu.memory_space<vmem>>, vector<8x128xf32>
      tpu.vector_store %arg4[%c0_19, %c0_20], %56 {strides = array<i32>} : memref<8x128xf32, #tpu.memory_space<vmem>>, vector<8x128xf32>,
    } else {
    }
    %true = arith.constant true
    %10 = arith.xori %7, %true : i1
    %11 = arith.extui %10 : i1 to i32
    %c0_i32_3 = arith.constant 0 : i32
    %12 = arith.cmpi ne, %11, %c0_i32_3 : i32
    scf.if %12 {
      %c1_i32_4 = arith.constant 1 : i32
      %13 = arith.muli %arg0, %c1_i32_4 : i32
      %14 = arith.addi %13, %arg1 : i32
      %c16_i32 = arith.constant 16 : i32
      %15 = arith.muli %14, %c16_i32 : i32
      %16 = tpu.iota {dimensions = array<i32: 0>} : vector<16x128xi32>
      %17 = tpu.iota {dimensions = array<i32: 1>} : vector<16x128xi32>
      %18 = vector.broadcast %15 : i32 to vector<16x128xi32>
      %19 = arith.addi %18, %16 : vector<16x128xi32>
      %c128_i32 = arith.constant 128 : i32
      %20 = vector.broadcast %c128_i32 : i32 to vector<16x128xi32>
      %21 = arith.muli %19, %20 : vector<16x128xi32>
      %22 = arith.addi %21, %17 : vector<16x128xi32>
      %c512_i32_5 = arith.constant 512 : i32
      %23 = vector.broadcast %c512_i32_5 : i32 to vector<16x128xi32>
      %24 = arith.cmpi slt, %22, %23 : vector<16x128xi32>
      %c0 = arith.constant 0 : index
      %c0_6 = arith.constant 0 : index
      %25 = vector.load %arg2[%c0, %c0_6] : memref<16x128xbf16, #tpu.memory_space<vmem>>, vector<16x128xbf16>
      %26 = arith.extf %25 : vector<16x128xbf16> to vector<16x128xf32>
      %cst = arith.constant 0.000000e+00 : f32
      %27 = vector.broadcast %cst : f32 to vector<16x128xf32>
      %28 = arith.select %24, %26, %27 : vector<16x128xi1>, vector<16x128xf32>
      %c0_7 = arith.constant 0 : index
      %c0_8 = arith.constant 0 : index
      %29 = vector.load %arg3[%c0_7, %c0_8] : memref<16x128xf32, #tpu.memory_space<vmem>>, vector<16x128xf32>
      %cst_9 = arith.constant 0.000000e+00 : f32
      %30 = vector.broadcast %cst_9 : f32 to vector<16x128xf32>
      %31 = arith.subf %30, %28 : vector<16x128xf32>
      %cst_10 = arith.constant 0.000000e+00 : f32
      %32 = vector.broadcast %cst_10 : f32 to vector<16x128xf32>
      %33 = arith.maximumf %31, %32 : vector<16x128xf32>
      %34 = vector.broadcast %cst_10 : f32 to vector<16x128xf32>
      %35 = arith.subf %31, %34 : vector<16x128xf32>
      %36 = arith.cmpf one, %35, %35 : vector<16x128xf32>
      %37 = vector.broadcast %cst_10 : f32 to vector<16x128xf32>
      %38 = arith.addf %31, %37 : vector<16x128xf32>
      %39 = math.absf %35 : vector<16x128xf32>
      %cst_11 = arith.constant 0.000000e+00 : f32
      %40 = vector.broadcast %cst_11 : f32 to vector<16x128xf32>
      %41 = arith.subf %40, %39 : vector<16x128xf32>
      %42 = math.exp %41 : vector<16x128xf32>
      %43 = math.log1p %42 : vector<16x128xf32>
      %44 = arith.addf %33, %43 : vector<16x128xf32>
      %45 = arith.select %36, %38, %44 : vector<16x128xi1>, vector<16x128xf32>
      %cst_12 = arith.constant 0.000000e+00 : f32
      %46 = vector.broadcast %cst_12 : f32 to vector<16x128xf32>
      %47 = arith.subf %46, %45 : vector<16x128xf32>
      %cst_13 = arith.constant -13.8155107 : f32
      %cst_14 = arith.constant -1.00000045E-6 : f32
      %48 = vector.broadcast %cst_13 : f32 to vector<16x128xf32>
      %49 = arith.maximumf %48, %47 : vector<16x128xf32>
      %50 = vector.broadcast %cst_14 : f32 to vector<16x128xf32>
      %51 = arith.minimumf %50, %49 : vector<16x128xf32>
      %52 = math.exp %51 : vector<16x128xf32>
      %53 = arith.subf %47, %28 : vector<16x128xf32>
      %cst_15 = arith.constant 1.000000e+00 : f32
      %54 = vector.broadcast %cst_15 : f32 to vector<16x128xf32>
      %55 = arith.subf %54, %52 : vector<16x128xf32>
      %56 = arith.mulf %55, %55 : vector<16x128xf32>
      %57 = arith.mulf %56, %51 : vector<16x128xf32>
      %58 = arith.mulf %52, %52 : vector<16x128xf32>
      %59 = arith.mulf %58, %53 : vector<16x128xf32>
      %cst_16 = arith.constant 1.000000e+00 : f32
      %60 = vector.broadcast %cst_16 : f32 to vector<16x128xf32>
      %61 = arith.cmpf oeq, %29, %60 : vector<16x128xf32>
      %cst_17 = arith.constant 0.000000e+00 : f32
      %62 = vector.broadcast %cst_17 : f32 to vector<16x128xf32>
      %63 = arith.cmpf oeq, %29, %62 : vector<16x128xf32>
      %cst_18 = arith.constant 0.000000e+00 : f32
      %64 = vector.broadcast %cst_18 : f32 to vector<16x128xf32>
      %65 = arith.select %63, %59, %64 : vector<16x128xi1>, vector<16x128xf32>
      %66 = arith.select %61, %57, %65 : vector<16x128xi1>, vector<16x128xf32>
      %cst_19 = arith.constant 0.000000e+00 : f32
      %67 = vector.broadcast %cst_19 : f32 to vector<16x128xf32>
      %68 = arith.select %24, %66, %67 : vector<16x128xi1>, vector<16x128xf32>
      %c0_20 = arith.constant 0 : index
      %c0_21 = arith.constant 0 : index
      %69 = vector.load %arg4[%c0_20, %c0_21] : memref<8x128xf32, #tpu.memory_space<vmem>>, vector<8x128xf32>
      %70 = vector.shape_cast %68 : vector<16x128xf32> to vector<2x8x128xf32>
      %cst_22 = arith.constant dense<0.000000e+00> : vector<8x128xf32>
      %71 = vector.multi_reduction <add>, %70, %cst_22 [0] : vector<2x8x128xf32> to vector<8x128xf32>
      %72 = arith.addf %69, %71 : vector<8x128xf32>
      %c0_23 = arith.constant 0 : index
      %c0_24 = arith.constant 0 : index
      %73 = vector.load %arg4[%c0_23, %c0_24] : memref<8x128xf32, #tpu.memory_space<vmem>>, vector<8x128xf32>
      tpu.vector_store %arg4[%c0_23, %c0_24], %72 {strides = array<i32>} : memref<8x128xf32, #tpu.memory_space<vmem>>, vector<8x128xf32>,
    } else {
    }
    return
  }
  func.func @transform_0(%arg0: i32, %arg1: i32) -> (i32, i32) {
    %c1_i32 = arith.constant 1 : i32
    %0 = arith.muli %arg0, %c1_i32 : i32
    %1 = arith.addi %0, %arg1 : i32
    %c0_i32 = arith.constant 0 : i32
    %2 = arith.minsi %1, %c0_i32 : i32
    %c0_i32_0 = arith.constant 0 : i32
    %c0_i32_1 = arith.constant 0 : i32
    return %2, %c0_i32_0 : i32, i32
  }
  func.func @transform_1(%arg0: i32, %arg1: i32) -> (i32, i32) {
    %c1_i32 = arith.constant 1 : i32
    %0 = arith.muli %arg0, %c1_i32 : i32
    %1 = arith.addi %0, %arg1 : i32
    %c0_i32 = arith.constant 0 : i32
    %2 = arith.minsi %1, %c0_i32 : i32
    %c0_i32_0 = arith.constant 0 : i32
    %c0_i32_1 = arith.constant 0 : i32
    return %2, %c0_i32_0 : i32, i32
  }
  func.func @transform_2(%arg0: i32, %arg1: i32) -> (i32, i32) {
    %c0_i32 = arith.constant 0 : i32
    %c0_i32_0 = arith.constant 0 : i32
    return %arg0, %c0_i32 : i32, i32
  }
}

</mosaic_0001>

<llo_original>
// kernel: tpu_custom_call.1
$region0: #{tpu_custom_call.1}
  #allocation0 [shape = 'u32[]', space=smem, size = 0x4, offset = 0x4, fixed_abs, tag = 'smem constant byte address 0x4 - core index']
  #allocation1 [shape = 'u32[144,128]{1,0:T(1,128)}', space=vmem, size = 0x12000, scoped, tag = 'internal scratch']
  %s0 = inlined_call_operand.hbm [shape: bf16[4,128], index: 0, kind: input, shape index: {}]
  %s1 = inlined_call_operand.hbm [shape: f32[4,128], index: 1, kind: input, shape index: {}]
  %s2 = inlined_call_operand.hbm [shape: f32[8,128], index: 2, kind: output, shape index: {}]
  %s3 = sld [smem:[#allocation0]]
  $region38: #{tpu_custom_call.1} parent=0
    _
  %s5 = ssub.s32 1, %s3
  %s6 = scalar_select 0, %s5, %s3
  $region1: #{tpu_custom_call.1} parent=0
    #allocation2 [shape = 'u8[4096]{0}', space=vmem, size = 0x1000, scoped, tag = 'input window, operand 0, single buffered']
    #allocation3 [shape = 's32[1]{0}', space=sflag, size = 0x4, scoped, tag = 'scoped memory for tpu_custom_call.1']
    #allocation4 [shape = 's32[1]{0}', space=sflag, size = 0x4, scoped, tag = 'scoped memory for tpu_custom_call.1']
    #allocation5 [shape = 'u8[8192]{0}', space=vmem, size = 0x2000, scoped, tag = 'input window, operand 1, single buffered']
    #allocation6 [shape = 's32[1]{0}', space=sflag, size = 0x4, scoped, tag = 'scoped memory for tpu_custom_call.1']
    #allocation7 [shape = 'u8[4096]{0}', space=vmem, size = 0x1000, scoped, tag = 'output window, operand 0, single buffered']
    %7 = vsyncpa [#allocation3], 0
    %8 = vsyncpa [#allocation6], 0
    %9 = vsyncpa [#allocation4], 0
    // Predicated region
    $region2: #{tpu_custom_call.1} parent=1 // pred_check
      _
    $region3: #{tpu_custom_call.1} parent=1 // pred_check_branch
      %11 = sbr.rel (0) target = $region5
    $region4: #{tpu_custom_call.1} parent=1 // pred_region
      %s12 = sadd.s32 0, 0
      %p13 = scmp.lt.s32.totalorder %s12, 0
      %s14 = scalar_select %p13, %s12, 0
      %s15 = smul.u32 4, %s14
      %s16 = ssub.s32 1, %s15
      %s17 = smul.u32 32, %s16
      %s19 = ssub.s32 128, %s17
      %20 = vsyncadd [#allocation3], %s19
      %p21 = scmp.ne.s32.totalorder 0, %s17
      %s22 = smul.addr %s15, 32
      %s23 = scalar_lea.hbm %s0, %s22
      %s24 = smul.u32 2, %s16
      %s25 = sshll.u32 [#allocation2], 4
      %s26 = int_to_ptr.vmem [resolvable:$true] %s25
      %s27 = sshll.u32 %s24, 4
      %31 = dma.hbm_to_vmem [thread:$0]  (%p21), %s23, %s27, %s26, [#allocation3], 32, 32, 2
    $region5: #{tpu_custom_call.1} parent=1 // pred_fallthru
      _
    // Predicated region
    $region6: #{tpu_custom_call.1} parent=1 // pred_check
      _
    $region7: #{tpu_custom_call.1} parent=1 // pred_check_branch
      %33 = sbr.rel (0) target = $region9
    $region8: #{tpu_custom_call.1} parent=1 // pred_region
      %s34 = sadd.s32 0, 0
      %p35 = scmp.lt.s32.totalorder %s34, 0
      %s36 = scalar_select %p35, %s34, 0
      %s37 = smul.u32 4, %s36
      %s38 = ssub.s32 1, %s37
      %s39 = smul.u32 64, %s38
      %s41 = ssub.s32 256, %s39
      %42 = vsyncadd [#allocation6], %s41
      %p43 = scmp.ne.s32.totalorder 0, %s39
      %s44 = smul.addr %s37, 64
      %s45 = scalar_lea.hbm %s1, %s44
      %s46 = smul.u32 4, %s38
      %s47 = sshll.u32 [#allocation5], 4
      %s48 = int_to_ptr.vmem [resolvable:$true] %s47
      %s49 = sshll.u32 %s46, 4
      %53 = dma.hbm_to_vmem [thread:$0]  (%p43), %s45, %s49, %s48, [#allocation6], 64, 64, 4
    $region9: #{tpu_custom_call.1} parent=1 // pred_fallthru
      _
    // Predicated region
    $region10: #{tpu_custom_call.1} parent=1 // pred_check
      _
    $region11: #{tpu_custom_call.1} parent=1 // pred_check_branch
      %55 = sbr.rel (0) target = $region13
    $region12: #{tpu_custom_call.1} parent=1 // pred_region
      %56 = dma.done [#allocation3], 128
    $region13: #{tpu_custom_call.1} parent=1 // pred_fallthru
      _
    // Predicated region
    $region14: #{tpu_custom_call.1} parent=1 // pred_check
      _
    $region15: #{tpu_custom_call.1} parent=1 // pred_check_branch
      %58 = sbr.rel (0) target = $region17
    $region16: #{tpu_custom_call.1} parent=1 // pred_region
      %59 = dma.done [#allocation6], 256
    $region17: #{tpu_custom_call.1} parent=1 // pred_fallthru
      _
    %s60 = sadd.s32 0, 0
    %p61 = scmp.lt.s32.totalorder %s60, 0
    %s62 = scalar_select %p61, %s60, 0
    %s63 = smul.u32 4, %s62
    %s64 = ssub.s32 1, %s63
    %s65 = smul.u32 32, %s64
    %s66 = sadd.s32 0, 0
    %p67 = scmp.lt.s32.totalorder %s66, 0
    %s68 = scalar_select %p67, %s66, 0
    %s69 = smul.u32 4, %s68
    %s70 = ssub.s32 1, %s69
    %s71 = smul.u32 64, %s70
    %p72 = scmp.eq.s32.totalorder 0, 0
    // Predicated region
    $region18: #{tpu_custom_call.1} parent=1 // pred_check
      %p73 = pneg %p72
    $region19: #{tpu_custom_call.1} parent=1 // pred_check_branch
      %75 = sbr.rel (%p73) target = $region21
    $region20: #{tpu_custom_call.1} parent=1 // pred_region
      %76 = vst [vmem:[#allocation7] sm:$0xff] 0.0
    $region21: #{tpu_custom_call.1} parent=1 // pred_fallthru
      _
    %s77 = sadd.s32 0, 0
    %s78 = smul.u32 %s77, 2048
    %s79 = sadd.s32 %s78, 2048
    %p80 = scmp.le.s32.totalorder %s79, 512
    // Predicated region
    $region22: #{tpu_custom_call.1} parent=1 // pred_check
      %p81 = pneg %p80
    $region23: #{tpu_custom_call.1} parent=1 // pred_check_branch
      %83 = sbr.rel (%p81) target = $region25
    $region24: #{tpu_custom_call.1} parent=1 // pred_region
      %v84 = vld [vmem:[#allocation7] sm:$0xff]
      %v85 = vld [vmem:[#allocation2] sm:$0x3]
      %v86 = vld [vmem:[#allocation2 + $0x2] sm:$0x3]
      %v87 = vld [vmem:[#allocation2 + $0x4] sm:$0x3]
      %v88 = vld [vmem:[#allocation2 + $0x6] sm:$0x3]
      %v89 = vunpack.c.l.bf16 %v85
      %v90 = vunpack.c.l.bf16 %v86
      %v91 = vunpack.c.l.bf16 %v87
      %v92 = vunpack.c.l.bf16 %v88
      %v93 = vld [vmem:[#allocation5] sm:$0xff]
      %v94 = vld [vmem:[#allocation5 + $0x8] sm:$0xff]
      %v95 = vsub.f32 0.0, %v89
      %v96 = vsub.f32 0.0, %v90
      %v97 = vsub.f32 0.0, %v91
      %v98 = vsub.f32 0.0, %v92
      %v99 = vmax.f32 %v95, 0.0
      %v100 = vmax.f32 %v96, 0.0
      %v101 = vmax.f32 %v97, 0.0
      %v102 = vmax.f32 %v98, 0.0
      %vm103 = vcmp.ne.f32.partialorder %v95, %v95
      %vm104 = vcmp.ne.f32.partialorder %v96, %v96
      %vm105 = vcmp.ne.f32.partialorder %v97, %v97
      %vm106 = vcmp.ne.f32.partialorder %v98, %v98
      %v107 = vadd.f32 %v95, 0.0
      %v108 = vadd.f32 %v96, 0.0
      %v109 = vadd.f32 %v97, 0.0
      %v110 = vadd.f32 %v98, 0.0
      %v111 = vand.u32 2147483647, %v95
      %v112 = vand.u32 2147483647, %v96
      %v113 = vand.u32 2147483647, %v97
      %v114 = vand.u32 2147483647, %v98
      %v115 = vsub.f32 0.0, %v111
      %v116 = vsub.f32 0.0, %v112
      %v117 = vsub.f32 0.0, %v113
      %v118 = vsub.f32 0.0, %v114
      %v119 = vmul.f32 %v115, 1.442695
      %v120 = vpow.pop %v119
      %v121 = vmul.f32 %v116, 1.442695
      %v122 = vpow.pop %v121
      %v123 = vmul.f32 %v117, 1.442695
      %v124 = vpow.pop %v123
      %v125 = vmul.f32 %v118, 1.442695
      %v126 = vpow.pop %v125
      %v127 = vadd.f32 %v120, 1.0
      %v128 = vlog2.pop %v127
      %v129 = vmul.f32 %v128, 0.6931472
      %v130 = vmul.f32 -0.5, %v120
      %v131 = vadd.f32 %v130, 1.0
      %v132 = vmul.f32 %v131, %v120
      %v133 = vand.u32 2147483647, %v120
      %vm134 = vcmp.lt.f32.partialorder %v133, 0.0004427343
      %v135 = vsel %vm134, %v132, %v129
      %v136 = vadd.f32 %v122, 1.0
      %v137 = vlog2.pop %v136
      %v138 = vmul.f32 %v137, 0.6931472
      %v139 = vmul.f32 -0.5, %v122
      %v140 = vadd.f32 %v139, 1.0
      %v141 = vmul.f32 %v140, %v122
      %v142 = vand.u32 2147483647, %v122
      %vm143 = vcmp.lt.f32.partialorder %v142, 0.0004427343
      %v144 = vsel %vm143, %v141, %v138
      %v145 = vadd.f32 %v124, 1.0
      %v146 = vlog2.pop %v145
      %v147 = vmul.f32 %v146, 0.6931472
      %v148 = vmul.f32 -0.5, %v124
      %v149 = vadd.f32 %v148, 1.0
      %v150 = vmul.f32 %v149, %v124
      %v151 = vand.u32 2147483647, %v124
      %vm152 = vcmp.lt.f32.partialorder %v151, 0.0004427343
      %v153 = vsel %vm152, %v150, %v147
      %v154 = vadd.f32 %v126, 1.0
      %v155 = vlog2.pop %v154
      %v156 = vmul.f32 %v155, 0.6931472
      %v157 = vmul.f32 -0.5, %v126
      %v158 = vadd.f32 %v157, 1.0
      %v159 = vmul.f32 %v158, %v126
      %v160 = vand.u32 2147483647, %v126
      %vm161 = vcmp.lt.f32.partialorder %v160, 0.0004427343
      %v162 = vsel %vm161, %v159, %v156
      %v163 = vadd.f32 %v99, %v135
      %v164 = vadd.f32 %v100, %v144
      %v165 = vadd.f32 %v101, %v153
      %v166 = vadd.f32 %v102, %v162
      %v167 = vsel %vm103, %v107, %v163
      %v168 = vsel %vm104, %v108, %v164
      %v169 = vsel %vm105, %v109, %v165
      %v170 = vsel %vm106, %v110, %v166
      %v171 = vsub.f32 0.0, %v167
      %v172 = vsub.f32 0.0, %v168
      %v173 = vsub.f32 0.0, %v169
      %v174 = vsub.f32 0.0, %v170
      %v175 = vmax.f32 %v171, -13.815511
      %v176 = vmax.f32 %v172, -13.815511
      %v177 = vmax.f32 %v173, -13.815511
      %v178 = vmax.f32 %v174, -13.815511
      %v179 = vmin.f32 %v175, -1.0000005e-06
      %v180 = vmin.f32 %v176, -1.0000005e-06
      %v181 = vmin.f32 %v177, -1.0000005e-06
      %v182 = vmin.f32 %v178, -1.0000005e-06
      %v183 = vmul.f32 %v179, 1.442695
      %v184 = vpow.pop %v183
      %v185 = vmul.f32 %v180, 1.442695
      %v186 = vpow.pop %v185
      %v187 = vmul.f32 %v181, 1.442695
      %v188 = vpow.pop %v187
      %v189 = vmul.f32 %v182, 1.442695
      %v190 = vpow.pop %v189
      %v191 = vsub.f32 %v171, %v89
      %v192 = vsub.f32 %v172, %v90
      %v193 = vsub.f32 %v173, %v91
      %v194 = vsub.f32 %v174, %v92
      %v195 = vsub.f32 1.0, %v184
      %v196 = vsub.f32 1.0, %v186
      %v197 = vsub.f32 1.0, %v188
      %v198 = vsub.f32 1.0, %v190
      %v199 = vmul.f32 %v195, %v195
      %v200 = vmul.f32 %v196, %v196
      %v201 = vmul.f32 %v197, %v197
      %v202 = vmul.f32 %v198, %v198
      %v203 = vmul.f32 %v199, %v179
      %v204 = vmul.f32 %v200, %v180
      %v205 = vmul.f32 %v201, %v181
      %v206 = vmul.f32 %v202, %v182
      %v207 = vmul.f32 %v184, %v184
      %v208 = vmul.f32 %v186, %v186
      %v209 = vmul.f32 %v188, %v188
      %v210 = vmul.f32 %v190, %v190
      %v211 = vmul.f32 %v207, %v191
      %v212 = vmul.f32 %v208, %v192
      %v213 = vmul.f32 %v209, %v193
      %v214 = vmul.f32 %v210, %v194
      %vm215 = vcmp.eq.f32.partialorder %v93, 1.0
      %vm216 = vcmp.eq.f32.partialorder %v94, 1.0
      %vm217 = vcmp.eq.f32.partialorder %v93, 0.0
      %vm218 = vcmp.eq.f32.partialorder %v94, 0.0
      %v223 = vcombine.low %v211, %v212
      %v224 = vcombine.low %v213, %v214
      %v227 = vsel %vm217, %v223, 0.0
      %v228 = vsel %vm218, %v224, 0.0
      %v233 = vcombine.low %v203, %v204
      %v234 = vcombine.low %v205, %v206
      %v237 = vsel %vm215, %v233, %v227
      %v238 = vsel %vm216, %v234, %v228
      %v239 = vadd.f32 %v237, %v238
      %v240 = vadd.f32 %v84, %v239
      %241 = vst [vmem:[#allocation7] sm:$0xff] %v240
    $region25: #{tpu_custom_call.1} parent=1 // pred_fallthru
      _
    %p242 = scmp.gt.s32.totalorder %s79, 512
    // Predicated region
    $region26: #{tpu_custom_call.1} parent=1 // pred_check
      %p243 = pneg %p242
    $region27: #{tpu_custom_call.1} parent=1 // pred_check_branch
      %245 = sbr.rel (%p243) target = $region29
    $region28: #{tpu_custom_call.1} parent=1 // pred_region
      %s246 = smul.u32 %s77, 16
      %v247 = vlaneseq
      %v248 = vshrl.u32 %v247, 7
      %v249 = vadd.s32 %v248, 8
      %v250 = vlaneseq
      %v251 = vand.u32 %v250, 127
      %v252 = vstv %s246
      %v253 = vadd.s32 %v252, %v248
      %v254 = vadd.s32 %v252, %v249
      %v255 = vmul.u32 %v253, 128
      %v256 = vmul.u32 %v254, 128
      %v257 = vadd.s32 %v255, %v251
      %v258 = vadd.s32 %v256, %v251
      %vm259 = vcmp.lt.s32.totalorder %v257, 512
      %vm260 = vcmp.lt.s32.totalorder %v258, 512
      %v261 = vld [vmem:[#allocation2] sm:$0x3]
      %v262 = vld [vmem:[#allocation2 + $0x2] sm:$0x3]
      %v263 = vld [vmem:[#allocation2 + $0x4] sm:$0x3]
      %v264 = vld [vmem:[#allocation2 + $0x6] sm:$0x3]
      %v265 = vunpack.c.l.bf16 %v261
      %v266 = vunpack.c.l.bf16 %v262
      %v267 = vunpack.c.l.bf16 %v263
      %v268 = vunpack.c.l.bf16 %v264
      %v273 = vcombine.low %v265, %v266
      %v274 = vcombine.low %v267, %v268
      %v277 = vsel %vm259, %v273, 0.0
      %v278 = vsel %vm260, %v274, 0.0
      %v279 = vld [vmem:[#allocation5] sm:$0xff]
      %v280 = vld [vmem:[#allocation5 + $0x8] sm:$0xff]
      %v281 = vsub.f32 0.0, %v277
      %v282 = vsub.f32 0.0, %v278
      %v283 = vmax.f32 %v281, 0.0
      %v284 = vmax.f32 %v282, 0.0
      %vm285 = vcmp.ne.f32.partialorder %v281, %v281
      %vm286 = vcmp.ne.f32.partialorder %v282, %v282
      %v287 = vadd.f32 %v281, 0.0
      %v288 = vadd.f32 %v282, 0.0
      %v289 = vand.u32 2147483647, %v281
      %v290 = vand.u32 2147483647, %v282
      %v291 = vsub.f32 0.0, %v289
      %v292 = vsub.f32 0.0, %v290
      %v293 = vmul.f32 %v291, 1.442695
      %v294 = vpow.pop %v293
      %v295 = vmul.f32 %v292, 1.442695
      %v296 = vpow.pop %v295
      %v297 = vadd.f32 %v294, 1.0
      %v298 = vlog2.pop %v297
      %v299 = vmul.f32 %v298, 0.6931472
      %v300 = vmul.f32 -0.5, %v294
      %v301 = vadd.f32 %v300, 1.0
      %v302 = vmul.f32 %v301, %v294
      %v303 = vand.u32 2147483647, %v294
      %vm304 = vcmp.lt.f32.partialorder %v303, 0.0004427343
      %v305 = vsel %vm304, %v302, %v299
      %v306 = vadd.f32 %v296, 1.0
      %v307 = vlog2.pop %v306
      %v308 = vmul.f32 %v307, 0.6931472
      %v309 = vmul.f32 -0.5, %v296
      %v310 = vadd.f32 %v309, 1.0
      %v311 = vmul.f32 %v310, %v296
      %v312 = vand.u32 2147483647, %v296
      %vm313 = vcmp.lt.f32.partialorder %v312, 0.0004427343
      %v314 = vsel %vm313, %v311, %v308
      %v315 = vadd.f32 %v283, %v305
      %v316 = vadd.f32 %v284, %v314
      %v317 = vsel %vm285, %v287, %v315
      %v318 = vsel %vm286, %v288, %v316
      %v319 = vsub.f32 0.0, %v317
      %v320 = vsub.f32 0.0, %v318
      %v321 = vmax.f32 %v319, -13.815511
      %v322 = vmax.f32 %v320, -13.815511
      %v323 = vmin.f32 %v321, -1.0000005e-06
      %v324 = vmin.f32 %v322, -1.0000005e-06
      %v325 = vmul.f32 %v323, 1.442695
      %v326 = vpow.pop %v325
      %v327 = vmul.f32 %v324, 1.442695
      %v328 = vpow.pop %v327
      %v329 = vsub.f32 %v319, %v277
      %v330 = vsub.f32 %v320, %v278
      %v331 = vsub.f32 1.0, %v326
      %v332 = vsub.f32 1.0, %v328
      %v333 = vmul.f32 %v331, %v331
      %v334 = vmul.f32 %v332, %v332
      %v335 = vmul.f32 %v333, %v323
      %v336 = vmul.f32 %v334, %v324
      %v337 = vmul.f32 %v326, %v326
      %v338 = vmul.f32 %v328, %v328
      %v339 = vmul.f32 %v337, %v329
      %v340 = vmul.f32 %v338, %v330
      %vm341 = vcmp.eq.f32.partialorder %v279, 1.0
      %vm342 = vcmp.eq.f32.partialorder %v280, 1.0
      %vm343 = vcmp.eq.f32.partialorder %v279, 0.0
      %vm344 = vcmp.eq.f32.partialorder %v280, 0.0
      %v345 = vsel %vm343, %v339, 0.0
      %v346 = vsel %vm344, %v340, 0.0
      %v347 = vsel %vm341, %v335, %v345
      %v348 = vsel %vm342, %v336, %v346
      %v349 = vsel %vm259, %v347, 0.0
      %v350 = vsel %vm260, %v348, 0.0
      %v351 = vld [vmem:[#allocation7] sm:$0xff]
      %v352 = vadd.f32 %v349, %v350
      %v353 = vadd.f32 %v351, %v352
      %354 = vst [vmem:[#allocation7] sm:$0xff] %v353
    $region29: #{tpu_custom_call.1} parent=1 // pred_fallthru
      _
    // Predicated region
    $region30: #{tpu_custom_call.1} parent=1 // pred_check
      _
    $region31: #{tpu_custom_call.1} parent=1 // pred_check_branch
      %356 = sbr.rel (0) target = $region33
    $region32: #{tpu_custom_call.1} parent=1 // pred_region
      %s358 = ssub.s32 128, 128
      %359 = vsyncadd [#allocation4], %s358
      %s361 = sshll.u32 [#allocation7], 4
      %s362 = int_to_ptr.vmem [resolvable:$true] %s361
      %364 = dma.vmem_to_hbm [thread:$0]  %s362, 128, %s2, [#allocation4]
    $region33: #{tpu_custom_call.1} parent=1 // pred_fallthru
      _
    // Predicated region
    $region34: #{tpu_custom_call.1} parent=1 // pred_check
      _
    $region35: #{tpu_custom_call.1} parent=1 // pred_check_branch
      %366 = sbr.rel (0) target = $region37
    $region36: #{tpu_custom_call.1} parent=1 // pred_region
      %367 = dma.done [#allocation4], 128
    $region37: #{tpu_custom_call.1} parent=1 // pred_fallthru
      _
    %368 = vsyncpa [#allocation3], 1
    %369 = vsyncpa [#allocation6], 1
    %370 = vsyncpa [#allocation4], 1

</llo_original>
